<compile_context>
chip_gen: v7x
topology: tpu7x:2x2x1
jax: 0.10.0
libtpu: 0.0.40
codegen_flags: <defaults>
</compile_context>

<pallas_src>
import jax
import jax.numpy as jnp
from jax.experimental import pallas as pl
from jax.experimental.pallas import tpu as pltpu

IMAGE_SIZE = 16                        # ToyData.IMAGE_SIZE (synthetic, small)
IN_FEATURES = IMAGE_SIZE * IMAGE_SIZE  # 256
OUT_FEATURES = 36                      # FullConnectedNet.out_features
NUM_CLASSES = 2                        # num_classification
HIDDEN_PAD = 128                       # hidden dim padded to full lane width
PADDED_CLASSES = 128                   # lane-dense classifier width (compute only)
NEG_BIAS = -1e30                       # "minus infinity" bias for fake classes
DEFAULT_BATCH_TILE = 2048              # rows per grid step (x tile = 2 MiB f32)


def _round_up(n, m):
    return pl.cdiv(n, m) * m


def fcnet_kernel(x_ref, w1_ref, b1_ref, w2_ref, b2_ref, out_ref):
    # x_ref:  (TB, 256) f32      w1_ref: (256, 128) bf16   b1_ref: (1, 128) f32
    # w2_ref: (128, 128) f32     b2_ref: (1, 128)  f32     out_ref: (TB, 2) f32

    # Cast x to bf16 in-kernel (VPU pack, hides under the x DMA stream), then
    # Linear 1 on the MXU with f32 accumulation. Bias add + sigmoid in f32.
    x = x_ref[...].astype(jnp.bfloat16)
    h = jnp.dot(x, w1_ref[...], preferred_element_type=jnp.float32) + b1_ref[...]
    h = jax.nn.sigmoid(h)                       # EUP, f32 vregs (v5e-safe)

    # Linear 2: classifier padded to 128 lane-dense columns (padded hidden
    # rows of w2 are zero -> no contribution from the padded hidden units).
    logits = jnp.dot(h, w2_ref[...],
                     preferred_element_type=jnp.float32) + b2_ref[...]

    # Numerically stable softmax over the class axis. Padded class columns
    # carry a -1e30 bias, so exp() underflows to exactly 0 there.
    m = jnp.max(logits, axis=1, keepdims=True)
    e = jnp.exp(logits - m)
    denom = jnp.sum(e, axis=1, keepdims=True)
    inv = pl.reciprocal(denom, approx=True)     # EUP vrcp
    inv = inv * (2.0 - denom * inv)             # one Newton step -> f32 accuracy

    # Store only the 2 real classes: 8 B/row writeback instead of 512 B/row.
    out_ref[...] = (e[:, :NUM_CLASSES] * inv).astype(out_ref.dtype)


def fcnet_forward(x, w1, b1, w2, b2, *, batch_tile=DEFAULT_BATCH_TILE):
    """x: (B, IN_FEATURES) f32 -> (B, NUM_CLASSES) f32 softmax probabilities."""
    B = x.shape[0]

    # Batch tile: multiple of 8 sublanes, capped so that (when B allows it)
    # the grid has at least 2 steps and both v7x TensorCores get work.
    half = _round_up(pl.cdiv(_round_up(B, 8), 2), 8)
    tb = max(8, min(batch_tile, half))
    grid = (pl.cdiv(B, tb),)

    # Tiny weight-side padding (negligible HBM traffic, done once per call):
    #  - hidden dim 36 -> 128 with zeros (sigmoid(0)=0.5 x zero w2 row = 0),
    #  - classifier cols 2 -> 128, fake classes get a -1e30 bias.
    w1p = jnp.pad(w1, ((0, 0), (0, HIDDEN_PAD - OUT_FEATURES))).astype(jnp.bfloat16)
    b1p = jnp.pad(b1, ((0, 0), (0, HIDDEN_PAD - OUT_FEATURES)))
    w2p = jnp.pad(w2, ((0, HIDDEN_PAD - OUT_FEATURES),
                       (0, PADDED_CLASSES - NUM_CLASSES)))
    b2p = jnp.pad(b2, ((0, 0), (0, PADDED_CLASSES - NUM_CLASSES)),
                  constant_values=NEG_BIAS)

    return pl.pallas_call(
        fcnet_kernel,
        out_shape=jax.ShapeDtypeStruct((B, NUM_CLASSES), jnp.float32),
        grid=grid,
        in_specs=[
            pl.BlockSpec((tb, IN_FEATURES), lambda i: (i, 0)),            # x (f32)
            pl.BlockSpec((IN_FEATURES, HIDDEN_PAD), lambda i: (0, 0)),    # w1 (bf16)
            pl.BlockSpec((1, HIDDEN_PAD), lambda i: (0, 0)),              # b1
            pl.BlockSpec((HIDDEN_PAD, PADDED_CLASSES), lambda i: (0, 0)), # w2
            pl.BlockSpec((1, PADDED_CLASSES), lambda i: (0, 0)),          # b2
        ],
        out_specs=pl.BlockSpec((tb, NUM_CLASSES), lambda i: (i, 0)),
        compiler_params=pltpu.CompilerParams(
            dimension_semantics=("parallel",)
        ),
    )(x, w1p, b1p, w2p, b2p)


def init_params(key):
    """Deterministic synthetic params matching nn.Linear shapes.

    nn.Linear(in, out) stores weight (out, in); we keep the transposed
    (in, out) layout directly so the kernel does x @ W + b.
    """
    k1, k2, k3, k4 = jax.random.split(key, 4)
    bound1 = 1.0 / (IN_FEATURES ** 0.5)
    bound2 = 1.0 / (OUT_FEATURES ** 0.5)
    w1 = jax.random.uniform(k1, (IN_FEATURES, OUT_FEATURES), jnp.float32,
                            minval=-bound1, maxval=bound1)
    b1 = jax.random.uniform(k2, (1, OUT_FEATURES), jnp.float32,
                            minval=-bound1, maxval=bound1)
    w2 = jax.random.uniform(k3, (OUT_FEATURES, NUM_CLASSES), jnp.float32,
                            minval=-bound2, maxval=bound2)
    b2 = jax.random.uniform(k4, (1, NUM_CLASSES), jnp.float32,
                            minval=-bound2, maxval=bound2)
    return w1, b1, w2, b2


def reference_forward(x, w1, b1, w2, b2):
    # Mirror the kernel's bf16 rounding of x/w1 (accumulation stays f32).
    xq = x.astype(jnp.bfloat16).astype(jnp.float32)
    w1q = w1.astype(jnp.bfloat16).astype(jnp.float32)
    h = jax.nn.sigmoid(xq @ w1q + b1)
    logits = h @ w2 + b2
    return jax.nn.softmax(logits, axis=1)


if __name__ == "__main__":
    key = jax.random.PRNGKey(0)
    kx, kp, kx2 = jax.random.split(key, 3)
    w1, b1, w2, b2 = init_params(kp)

    # Small-batch check (single grid step, boundary block 2 valid of 8 rows).
    batch = 2
    x = jax.random.normal(kx, (batch, IN_FEATURES), jnp.float32)
    out = jax.block_until_ready(fcnet_forward(x, w1, b1, w2, b2))
    ref = reference_forward(x, w1, b1, w2, b2)
    assert out.shape == (batch, NUM_CLASSES)
    assert jnp.allclose(out, ref, atol=1e-4, rtol=1e-4)
    assert jnp.allclose(jnp.sum(out, axis=1), jnp.ones((batch,)), atol=1e-4)

    # Multi-step check (2 grid steps + ragged last block: 1000 -> 2 x 504).
    batch2 = 1000
    x2 = jax.random.normal(kx2, (batch2, IN_FEATURES), jnp.float32)
    out2 = jax.block_until_ready(fcnet_forward(x2, w1, b1, w2, b2))
    ref2 = reference_forward(x2, w1, b1, w2, b2)
    assert out2.shape == (batch2, NUM_CLASSES)
    assert jnp.allclose(out2, ref2, atol=1e-4, rtol=1e-4)
    assert jnp.allclose(jnp.sum(out2, axis=1), jnp.ones((batch2,)), atol=1e-4)

    print("KERNEL_OK")
</pallas_src>

<mosaic_0001>
module attributes {stable_mosaic.version = 11 : i64} {
  func.func @fcnet_kernel(%arg0: i32, %arg1: memref<8x256xf32, #tpu.memory_space<vmem>>, %arg2: memref<256x128xbf16, #tpu.memory_space<vmem>>, %arg3: memref<1x128xf32, #tpu.memory_space<vmem>>, %arg4: memref<128x128xf32, #tpu.memory_space<vmem>>, %arg5: memref<1x128xf32, #tpu.memory_space<vmem>>, %arg6: memref<8x2xf32, #tpu.memory_space<vmem>>) attributes {dimension_semantics = [#tpu.dimension_semantics<parallel>], iteration_bounds = array<i64: 1>, scalar_prefetch = 0 : i64, scratch_operands = 0 : i64, tpu.core_type = #tpu.core_type<tc>, window_params = [{transform_indices = @transform_0, window_bounds = array<i64: 8, 256>}, {pipeline_mode = #tpu.pipeline_mode<synchronous>, transform_indices = @transform_1, window_bounds = array<i64: 256, 128>}, {pipeline_mode = #tpu.pipeline_mode<synchronous>, transform_indices = @transform_2, window_bounds = array<i64: 1, 128>}, {pipeline_mode = #tpu.pipeline_mode<synchronous>, transform_indices = @transform_3, window_bounds = array<i64: 128, 128>}, {pipeline_mode = #tpu.pipeline_mode<synchronous>, transform_indices = @transform_4, window_bounds = array<i64: 1, 128>}, {transform_indices = @transform_5, window_bounds = array<i64: 8, 2>}]} {
    %c0 = arith.constant 0 : index
    %c0_0 = arith.constant 0 : index
    %0 = vector.load %arg1[%c0, %c0_0] : memref<8x256xf32, #tpu.memory_space<vmem>>, vector<8x256xf32>
    %1 = arith.truncf %0 : vector<8x256xf32> to vector<8x256xbf16>
    %c0_1 = arith.constant 0 : index
    %c0_2 = arith.constant 0 : index
    %2 = vector.load %arg2[%c0_1, %c0_2] : memref<256x128xbf16, #tpu.memory_space<vmem>>, vector<256x128xbf16>
    %cst = arith.constant dense<0.000000e+00> : vector<8x128xf32>
    %3 = tpu.matmul %1, %2, %cst {dimension_numbers = #tpu.dot_dimension_numbers<[1], [0], [0], [1], [0, 0, 1, 1], [], []>} : vector<8x256xbf16>, vector<256x128xbf16>, vector<8x128xf32> -> vector<8x128xf32>
    %c0_3 = arith.constant 0 : index
    %c0_4 = arith.constant 0 : index
    %4 = vector.load %arg3[%c0_3, %c0_4] : memref<1x128xf32, #tpu.memory_space<vmem>>, vector<1x128xf32>
    %5 = vector.broadcast %4 : vector<1x128xf32> to vector<8x128xf32>
    %6 = arith.addf %3, %5 : vector<8x128xf32>
    %7 = arith.negf %6 : vector<8x128xf32>
    %8 = math.exp %7 : vector<8x128xf32>
    %cst_5 = arith.constant 1.000000e+00 : f32
    %9 = vector.broadcast %cst_5 : f32 to vector<8x128xf32>
    %10 = arith.addf %9, %8 : vector<8x128xf32>
    %11 = arith.divf %9, %10 : vector<8x128xf32>
    %c0_6 = arith.constant 0 : index
    %c0_7 = arith.constant 0 : index
    %12 = vector.load %arg4[%c0_6, %c0_7] : memref<128x128xf32, #tpu.memory_space<vmem>>, vector<128x128xf32>
    %cst_8 = arith.constant dense<0.000000e+00> : vector<8x128xf32>
    %13 = tpu.matmul %11, %12, %cst_8 {dimension_numbers = #tpu.dot_dimension_numbers<[1], [0], [0], [1], [0, 0, 1, 1], [], []>} : vector<8x128xf32>, vector<128x128xf32>, vector<8x128xf32> -> vector<8x128xf32>
    %c0_9 = arith.constant 0 : index
    %c0_10 = arith.constant 0 : index
    %14 = vector.load %arg5[%c0_9, %c0_10] : memref<1x128xf32, #tpu.memory_space<vmem>>, vector<1x128xf32>
    %15 = vector.broadcast %14 : vector<1x128xf32> to vector<8x128xf32>
    %16 = arith.addf %13, %15 : vector<8x128xf32>
    %cst_11 = arith.constant dense<0xFF800000> : vector<8xf32>
    %17 = vector.multi_reduction <maximumf>, %16, %cst_11 [1] : vector<8x128xf32> to vector<8xf32>
    %18 = vector.shape_cast %17 : vector<8xf32> to vector<8x1xf32>
    %19 = vector.broadcast %18 : vector<8x1xf32> to vector<8x128xf32>
    %20 = arith.subf %16, %19 : vector<8x128xf32>
    %21 = math.exp %20 : vector<8x128xf32>
    %cst_12 = arith.constant dense<0.000000e+00> : vector<8xf32>
    %22 = vector.multi_reduction <add>, %21, %cst_12 [1] : vector<8x128xf32> to vector<8xf32>
    %23 = vector.shape_cast %22 : vector<8xf32> to vector<8x1xf32>
    %24 = tpu.reciprocal %23 {approx = true} : vector<8x1xf32> -> vector<8x1xf32>
    %25 = arith.mulf %23, %24 : vector<8x1xf32>
    %cst_13 = arith.constant 2.000000e+00 : f32
    %26 = vector.broadcast %cst_13 : f32 to vector<8x1xf32>
    %27 = arith.subf %26, %25 : vector<8x1xf32>
    %28 = arith.mulf %24, %27 : vector<8x1xf32>
    %29 = vector.extract_strided_slice %21 {offsets = [0, 0], sizes = [8, 2], strides = [1, 1]} : vector<8x128xf32> to vector<8x2xf32>
    %30 = vector.broadcast %28 : vector<8x1xf32> to vector<8x2xf32>
    %31 = arith.mulf %29, %30 : vector<8x2xf32>
    %c0_14 = arith.constant 0 : index
    %c0_15 = arith.constant 0 : index
    %32 = vector.load %arg6[%c0_14, %c0_15] : memref<8x2xf32, #tpu.memory_space<vmem>>, vector<8x2xf32>
    tpu.vector_store %arg6[%c0_14, %c0_15], %31 {strides = array<i32>} : memref<8x2xf32, #tpu.memory_space<vmem>>, vector<8x2xf32>,
    return
  }
  func.func @transform_0(%arg0: i32) -> (i32, i32) {
    %c0_i32 = arith.constant 0 : i32
    %c0_i32_0 = arith.constant 0 : i32
    return %arg0, %c0_i32 : i32, i32
  }
  func.func @transform_1(%arg0: i32) -> (i32, i32) {
    %c0_i32 = arith.constant 0 : i32
    %c0_i32_0 = arith.constant 0 : i32
    %c0_i32_1 = arith.constant 0 : i32
    return %c0_i32, %c0_i32_0 : i32, i32
  }
  func.func @transform_2(%arg0: i32) -> (i32, i32) {
    %c0_i32 = arith.constant 0 : i32
    %c0_i32_0 = arith.constant 0 : i32
    %c0_i32_1 = arith.constant 0 : i32
    return %c0_i32, %c0_i32_0 : i32, i32
  }
  func.func @transform_3(%arg0: i32) -> (i32, i32) {
    %c0_i32 = arith.constant 0 : i32
    %c0_i32_0 = arith.constant 0 : i32
    %c0_i32_1 = arith.constant 0 : i32
    return %c0_i32, %c0_i32_0 : i32, i32
  }
  func.func @transform_4(%arg0: i32) -> (i32, i32) {
    %c0_i32 = arith.constant 0 : i32
    %c0_i32_0 = arith.constant 0 : i32
    %c0_i32_1 = arith.constant 0 : i32
    return %c0_i32, %c0_i32_0 : i32, i32
  }
  func.func @transform_5(%arg0: i32) -> (i32, i32) {
    %c0_i32 = arith.constant 0 : i32
    %c0_i32_0 = arith.constant 0 : i32
    return %arg0, %c0_i32 : i32, i32
  }
}

</mosaic_0001>

<llo_original>
// kernel: tpu_custom_call.1
$region0: #{tpu_custom_call.1}
  #allocation0 [shape = 'u32[]', space=smem, size = 0x4, offset = 0x4, fixed_abs, tag = 'smem constant byte address 0x4 - core index']
  #allocation1 [shape = 'u32[144,128]{1,0:T(1,128)}', space=vmem, size = 0x12000, scoped, tag = 'internal scratch']
  %s0 = inlined_call_operand.hbm [shape: f32[2,256], index: 0, kind: input, shape index: {}]
  %s1 = inlined_call_operand.hbm [shape: bf16[256,128], index: 1, kind: input, shape index: {}]
  %s2 = inlined_call_operand.vmem [shape: f32[1,128], index: 2, kind: input, shape index: {}]
  %s3 = inlined_call_operand.hbm [shape: f32[128,128], index: 3, kind: input, shape index: {}]
  %s4 = inlined_call_operand.vmem [shape: f32[1,128], index: 4, kind: input, shape index: {}]
  %s5 = inlined_call_operand.hbm [shape: f32[2,2], index: 5, kind: output, shape index: {}]
  %s6 = sld [smem:[#allocation0]]
  $region42: #{tpu_custom_call.1} parent=0
    _
  %s8 = ssub.s32 1, %s6
  %s9 = scalar_select 0, %s8, %s6
  $region1: #{tpu_custom_call.1} parent=0
    #allocation2 [shape = 'u8[8192]{0}', space=vmem, size = 0x2000, scoped, tag = 'input window, operand 0, single buffered']
    #allocation3 [shape = 's32[1]{0}', space=sflag, size = 0x4, scoped, tag = 'scoped memory for tpu_custom_call.1']
    #allocation4 [shape = 's32[1]{0}', space=sflag, size = 0x4, scoped, tag = 'scoped memory for tpu_custom_call.1']
    #allocation5 [shape = 'u8[65536]{0}', space=vmem, size = 0x10000, scoped, tag = 'input window, operand 1, single buffered']
    #allocation6 [shape = 's32[1]{0}', space=sflag, size = 0x4, scoped, tag = 'scoped memory for tpu_custom_call.1']
    #allocation7 [shape = 'u8[65536]{0}', space=vmem, size = 0x10000, scoped, tag = 'input window, operand 3, single buffered']
    #allocation8 [shape = 'u8[4096]{0}', space=vmem, size = 0x1000, scoped, tag = 'output window, operand 0, single buffered']
    %10 = vsyncpa [#allocation3], 0
    %11 = vsyncpa [#allocation6], 0
    %12 = vsyncpa [#allocation4], 0
    // Predicated region
    $region2: #{tpu_custom_call.1} parent=1 // pred_check
      _
    $region3: #{tpu_custom_call.1} parent=1 // pred_check_branch
      %14 = sbr.rel (0) target = $region5
    $region4: #{tpu_custom_call.1} parent=1 // pred_region
      %s16 = ssub.s32 256, 64
      %17 = vsyncadd [#allocation3], %s16
      %s18 = sshll.u32 [#allocation2], 4
      %s19 = int_to_ptr.vmem [resolvable:$true] %s18
      %24 = dma.hbm_to_vmem [thread:$0]  %s0, 64, %s19, [#allocation3], 64, 64, 4
    $region5: #{tpu_custom_call.1} parent=1 // pred_fallthru
      _
    // Predicated region
    $region6: #{tpu_custom_call.1} parent=1 // pred_check
      _
    $region7: #{tpu_custom_call.1} parent=1 // pred_check_branch
      %26 = sbr.rel (0) target = $region9
    $region8: #{tpu_custom_call.1} parent=1 // pred_region
      %s28 = ssub.s32 2048, 2048
      %29 = vsyncadd [#allocation6], %s28
      %s30 = sshll.u32 [#allocation5], 4
      %s31 = int_to_ptr.vmem [resolvable:$true] %s30
      %36 = dma.hbm_to_vmem [thread:$0]  %s1, 2048, %s31, [#allocation6], 64, 64, 4
    $region9: #{tpu_custom_call.1} parent=1 // pred_fallthru
      _
    // Predicated region
    $region10: #{tpu_custom_call.1} parent=1 // pred_check
      _
    $region11: #{tpu_custom_call.1} parent=1 // pred_check_branch
      %38 = sbr.rel (0) target = $region13
    $region12: #{tpu_custom_call.1} parent=1 // pred_region
      _
    $region13: #{tpu_custom_call.1} parent=1 // pred_fallthru
      _
    // Predicated region
    $region14: #{tpu_custom_call.1} parent=1 // pred_check
      _
    $region15: #{tpu_custom_call.1} parent=1 // pred_check_branch
      %40 = sbr.rel (0) target = $region17
    $region16: #{tpu_custom_call.1} parent=1 // pred_region
      %s42 = ssub.s32 2048, 2048
      %43 = vsyncadd [#allocation6], %s42
      %s44 = sshll.u32 [#allocation7], 4
      %s45 = int_to_ptr.vmem [resolvable:$true] %s44
      %50 = dma.hbm_to_vmem [thread:$0]  %s3, 2048, %s45, [#allocation6], 128, 128, 8
    $region17: #{tpu_custom_call.1} parent=1 // pred_fallthru
      _
    // Predicated region
    $region18: #{tpu_custom_call.1} parent=1 // pred_check
      _
    $region19: #{tpu_custom_call.1} parent=1 // pred_check_branch
      %52 = sbr.rel (0) target = $region21
    $region20: #{tpu_custom_call.1} parent=1 // pred_region
      _
    $region21: #{tpu_custom_call.1} parent=1 // pred_fallthru
      _
    // Predicated region
    $region22: #{tpu_custom_call.1} parent=1 // pred_check
      _
    $region23: #{tpu_custom_call.1} parent=1 // pred_check_branch
      %54 = sbr.rel (0) target = $region25
    $region24: #{tpu_custom_call.1} parent=1 // pred_region
      %55 = dma.done [#allocation3], 256
    $region25: #{tpu_custom_call.1} parent=1 // pred_fallthru
      _
    // Predicated region
    $region26: #{tpu_custom_call.1} parent=1 // pred_check
      _
    $region27: #{tpu_custom_call.1} parent=1 // pred_check_branch
      %57 = sbr.rel (0) target = $region29
    $region28: #{tpu_custom_call.1} parent=1 // pred_region
      %58 = dma.done [#allocation6], 2048
    $region29: #{tpu_custom_call.1} parent=1 // pred_fallthru
      _
    // Predicated region
    $region30: #{tpu_custom_call.1} parent=1 // pred_check
      _
    $region31: #{tpu_custom_call.1} parent=1 // pred_check_branch
      %60 = sbr.rel (0) target = $region33
    $region32: #{tpu_custom_call.1} parent=1 // pred_region
      %61 = dma.done [#allocation6], 2048
    $region33: #{tpu_custom_call.1} parent=1 // pred_fallthru
      _
    %v63 = vld [vmem:[#allocation2] sm:$0xf]
    %v64 = vld [vmem:[#allocation2 + $0x4] sm:$0xf]
    %v65 = vld [vmem:[#allocation2 + $0x8] sm:$0xf]
    %v66 = vld [vmem:[#allocation2 + $0xc] sm:$0xf]
    %v71 = vcombine.low %v63, %v64
    %v72 = vcombine.low %v65, %v66
    %v74 = vunpack.c.l.s4 1983009808
    %v75 = vunpack.c.0.s8 %v74
    %v76 = vlaneseq
    %v77 = vshrl.u32 %v76, 7
    %v78 = vsub.s32 %v75, %v77
    %v79 = vrot.slane %v71, %v78
    %v81 = vunpack.c.l.s4 1983009808
    %v82 = vunpack.c.0.s8 %v81
    %v83 = vlaneseq
    %v84 = vshrl.u32 %v83, 7
    %v85 = vsub.s32 %v82, %v84
    %v86 = vrot.slane %v72, %v85
    %v87 = vcombine.low %v79, %v86
    %v88 = vcombine.high %v79, %v86
    %v91 = vpack.c.bf16 %v87, %v87
    %v92 = vpack.c.bf16 %v88, %v88
    %v93 = vld [vmem:[#allocation5] sm:$0xf]
    %v94 = vld [vmem:[#allocation5 + $0x4] sm:$0xf]
    %v95 = vld [vmem:[#allocation5 + $0x8] sm:$0xf]
    %v96 = vld [vmem:[#allocation5 + $0xc] sm:$0xf]
    %v97 = vld [vmem:[#allocation5 + $0x10] sm:$0xf]
    %v98 = vld [vmem:[#allocation5 + $0x14] sm:$0xf]
    %v99 = vld [vmem:[#allocation5 + $0x18] sm:$0xf]
    %v100 = vld [vmem:[#allocation5 + $0x1c] sm:$0xf]
    %v101 = vld [vmem:[#allocation5 + $0x20] sm:$0xf]
    %v102 = vld [vmem:[#allocation5 + $0x24] sm:$0xf]
    %v103 = vld [vmem:[#allocation5 + $0x28] sm:$0xf]
    %v104 = vld [vmem:[#allocation5 + $0x2c] sm:$0xf]
    %v105 = vld [vmem:[#allocation5 + $0x30] sm:$0xf]
    %v106 = vld [vmem:[#allocation5 + $0x34] sm:$0xf]
    %v107 = vld [vmem:[#allocation5 + $0x38] sm:$0xf]
    %v108 = vld [vmem:[#allocation5 + $0x3c] sm:$0xf]
    %v109 = vld [vmem:[#allocation5 + $0x40] sm:$0xf]
    %v110 = vld [vmem:[#allocation5 + $0x44] sm:$0xf]
    %v111 = vld [vmem:[#allocation5 + $0x48] sm:$0xf]
    %v112 = vld [vmem:[#allocation5 + $0x4c] sm:$0xf]
    %v113 = vld [vmem:[#allocation5 + $0x50] sm:$0xf]
    %v114 = vld [vmem:[#allocation5 + $0x54] sm:$0xf]
    %v115 = vld [vmem:[#allocation5 + $0x58] sm:$0xf]
    %v116 = vld [vmem:[#allocation5 + $0x5c] sm:$0xf]
    %v117 = vld [vmem:[#allocation5 + $0x60] sm:$0xf]
    %v118 = vld [vmem:[#allocation5 + $0x64] sm:$0xf]
    %v119 = vld [vmem:[#allocation5 + $0x68] sm:$0xf]
    %v120 = vld [vmem:[#allocation5 + $0x6c] sm:$0xf]
    %v121 = vld [vmem:[#allocation5 + $0x70] sm:$0xf]
    %v122 = vld [vmem:[#allocation5 + $0x74] sm:$0xf]
    %v123 = vld [vmem:[#allocation5 + $0x78] sm:$0xf]
    %v124 = vld [vmem:[#allocation5 + $0x7c] sm:$0xf]
    %v125 = vld [vmem:[%s2] sm:$0x1]
    %v127 = vlaneseq
    %v128 = vshrl.u32 %v127, 7
    %v129 = vsub.s32 0, %v128
    %v130 = vrot.slane %v125, %v129
    %v164 = vunpack.c.l.b16 %v93
    %v165 = vunpack.c.l.b16 %v94
    %v166 = vunpack.c.l.b16 %v95
    %v167 = vunpack.c.l.b16 %v96
    %v168 = vunpack.c.l.b16 %v97
    %v169 = vunpack.c.l.b16 %v98
    %v170 = vunpack.c.l.b16 %v99
    %v171 = vunpack.c.l.b16 %v100
    %v172 = vunpack.c.l.b16 %v101
    %v173 = vunpack.c.l.b16 %v102
    %v174 = vunpack.c.l.b16 %v103
    %v175 = vunpack.c.l.b16 %v104
    %v176 = vunpack.c.l.b16 %v105
    %v177 = vunpack.c.l.b16 %v106
    %v178 = vunpack.c.l.b16 %v107
    %v179 = vunpack.c.l.b16 %v108
    %v180 = vunpack.c.l.b16 %v109
    %v181 = vunpack.c.l.b16 %v110
    %v182 = vunpack.c.l.b16 %v111
    %v183 = vunpack.c.l.b16 %v112
    %v184 = vunpack.c.l.b16 %v113
    %v185 = vunpack.c.l.b16 %v114
    %v186 = vunpack.c.l.b16 %v115
    %v187 = vunpack.c.l.b16 %v116
    %v188 = vunpack.c.l.b16 %v117
    %v189 = vunpack.c.l.b16 %v118
    %v190 = vunpack.c.l.b16 %v119
    %v191 = vunpack.c.l.b16 %v120
    %v192 = vunpack.c.l.b16 %v121
    %v193 = vunpack.c.l.b16 %v122
    %v194 = vunpack.c.l.b16 %v123
    %v195 = vunpack.c.l.b16 %v124
    %v196 = vpack.c.b16 %v165, %v164
    %v197 = vpack.c.b16 %v167, %v166
    %v198 = vpack.c.b16 %v169, %v168
    %v199 = vpack.c.b16 %v171, %v170
    %v200 = vpack.c.b16 %v173, %v172
    %v201 = vpack.c.b16 %v175, %v174
    %v202 = vpack.c.b16 %v177, %v176
    %v203 = vpack.c.b16 %v179, %v178
    %v204 = vpack.c.b16 %v181, %v180
    %v205 = vpack.c.b16 %v183, %v182
    %v206 = vpack.c.b16 %v185, %v184
    %v207 = vpack.c.b16 %v187, %v186
    %v208 = vpack.c.b16 %v189, %v188
    %v209 = vpack.c.b16 %v191, %v190
    %v210 = vpack.c.b16 %v193, %v192
    %v211 = vpack.c.b16 %v195, %v194
    %228 = vmatprep.subr.bf16.mxu0 0
    %229 = vmatpush1.bf16.msra.mxu0 %v196
    %230 = vmatprep.subr.bf16.mxu0 0
    %231 = vmatpush1.bf16.msra.mxu0 %v197
    %232 = vmatprep.subr.bf16.mxu0 0
    %233 = vmatpush1.bf16.msra.mxu0 %v198
    %234 = vmatprep.subr.bf16.mxu0 0
    %235 = vmatpush1.bf16.msra.mxu0 %v199
    %236 = vmatprep.subr.bf16.mxu0 0
    %237 = vmatpush1.bf16.msra.mxu0 %v200
    %238 = vmatprep.subr.bf16.mxu0 0
    %239 = vmatpush1.bf16.msra.mxu0 %v201
    %240 = vmatprep.subr.bf16.mxu0 0
    %241 = vmatpush1.bf16.msra.mxu0 %v202
    %242 = vmatprep.subr.bf16.mxu0 0
    %243 = vmatpush1.bf16.msra.mxu0 %v203
    %244 = vmatprep.subr.bf16.mxu0 0
    %245 = vmatpush1.bf16.msra.mxu0 %v204
    %246 = vmatprep.subr.bf16.mxu0 0
    %247 = vmatpush1.bf16.msra.mxu0 %v205
    %248 = vmatprep.subr.bf16.mxu0 0
    %249 = vmatpush1.bf16.msra.mxu0 %v206
    %250 = vmatprep.subr.bf16.mxu0 0
    %251 = vmatpush1.bf16.msra.mxu0 %v207
    %252 = vmatprep.subr.bf16.mxu0 0
    %253 = vmatpush1.bf16.msra.mxu0 %v208
    %254 = vmatprep.subr.bf16.mxu0 0
    %255 = vmatpush1.bf16.msra.mxu0 %v209
    %256 = vmatprep.subr.bf16.mxu0 0
    %257 = vmatpush1.bf16.msra.mxu0 %v210
    %258 = vmatprep.subr.bf16.mxu0 0
    %259 = vmatpush1.bf16.msra.mxu0 %v211
    %260 = vmatprep.mubr.bf16.mxu0 %v92
    %261 = vmatmul.mubr.bf16.gmra.mrb[0].mxu0 %v91
    %v262 = vpop.f32.mrb[0].mxu0
    %v263 = vadd.f32 %v130, %v262
    %v264 = vpop.f32.mrb[0].mxu0
    %v265 = vpop.f32.mrb[0].mxu0
    %v266 = vpop.f32.mrb[0].mxu0
    %267 = vdwg.mxu0
    %v268 = vxor.u32 %v263, 2147483648
    %v269 = vmul.f32 %v268, 1.442695
    %v270 = vpow.pop %v269
    %v271 = vadd.f32 %v270, 1.0
    %v272 = vrcp.pop %v271
    %v273 = vmul.f32 1.0, %v272
    %v274 = vld [vmem:[#allocation7] sm:$0xff]
    %v275 = vld [vmem:[#allocation7 + $0x8] sm:$0xff]
    %v276 = vld [vmem:[#allocation7 + $0x10] sm:$0xff]
    %v277 = vld [vmem:[#allocation7 + $0x18] sm:$0xff]
    %v278 = vld [vmem:[#allocation7 + $0x20] sm:$0xff]
    %v279 = vld [vmem:[#allocation7 + $0x28] sm:$0xff]
    %v280 = vld [vmem:[#allocation7 + $0x30] sm:$0xff]
    %v281 = vld [vmem:[#allocation7 + $0x38] sm:$0xff]
    %v282 = vld [vmem:[#allocation7 + $0x40] sm:$0xff]
    %v283 = vld [vmem:[#allocation7 + $0x48] sm:$0xff]
    %v284 = vld [vmem:[#allocation7 + $0x50] sm:$0xff]
    %v285 = vld [vmem:[#allocation7 + $0x58] sm:$0xff]
    %v286 = vld [vmem:[#allocation7 + $0x60] sm:$0xff]
    %v287 = vld [vmem:[#allocation7 + $0x68] sm:$0xff]
    %v288 = vld [vmem:[#allocation7 + $0x70] sm:$0xff]
    %v289 = vld [vmem:[#allocation7 + $0x78] sm:$0xff]
    %v290 = vld [vmem:[%s4] sm:$0x1]
    %v292 = vlaneseq
    %v293 = vshrl.u32 %v292, 7
    %v294 = vsub.s32 0, %v293
    %v295 = vrot.slane %v290, %v294
    %297 = vmatprep.subr.mxu0 0.0
    %298 = vmatpush1.msra.mxu0 %v274
    %299 = vmatprep.subr.mxu0 0.0
    %300 = vmatpush1.msra.mxu0 %v275
    %301 = vmatprep.subr.mxu0 0.0
    %302 = vmatpush1.msra.mxu0 %v276
    %303 = vmatprep.subr.mxu0 0.0
    %304 = vmatpush1.msra.mxu0 %v277
    %305 = vmatprep.subr.mxu0 0.0
    %306 = vmatpush1.msra.mxu0 %v278
    %307 = vmatprep.subr.mxu0 0.0
    %308 = vmatpush1.msra.mxu0 %v279
    %309 = vmatprep.subr.mxu0 0.0
    %310 = vmatpush1.msra.mxu0 %v280
    %311 = vmatprep.subr.mxu0 0.0
    %312 = vmatpush1.msra.mxu0 %v281
    %313 = vmatprep.subr.mxu0 0.0
    %314 = vmatpush1.msra.mxu0 %v282
    %315 = vmatprep.subr.mxu0 0.0
    %316 = vmatpush1.msra.mxu0 %v283
    %317 = vmatprep.subr.mxu0 0.0
    %318 = vmatpush1.msra.mxu0 %v284
    %319 = vmatprep.subr.mxu0 0.0
    %320 = vmatpush1.msra.mxu0 %v285
    %321 = vmatprep.subr.mxu0 0.0
    %322 = vmatpush1.msra.mxu0 %v286
    %323 = vmatprep.subr.mxu0 0.0
    %324 = vmatpush1.msra.mxu0 %v287
    %325 = vmatprep.subr.mxu0 0.0
    %326 = vmatpush1.msra.mxu0 %v288
    %327 = vmatprep.subr.mxu0 0.0
    %328 = vmatpush1.msra.mxu0 %v289
    %329 = vmatprep.subr.mxu0 0.0
    %330 = vmatpush1.msra.mxu0 0.0
    %331 = vmatprep.subr.mxu0 0.0
    %332 = vmatpush1.msra.mxu0 0.0
    %333 = vmatprep.subr.mxu0 0.0
    %334 = vmatpush1.msra.mxu0 0.0
    %335 = vmatprep.subr.mxu0 0.0
    %336 = vmatpush1.msra.mxu0 0.0
    %337 = vmatprep.subr.mxu0 0.0
    %338 = vmatpush1.msra.mxu0 0.0
    %339 = vmatprep.subr.mxu0 0.0
    %340 = vmatpush1.msra.mxu0 0.0
    %341 = vmatprep.subr.mxu0 0.0
    %342 = vmatpush1.msra.mxu0 0.0
    %343 = vmatprep.subr.mxu0 0.0
    %344 = vmatpush1.msra.mxu0 0.0
    %345 = vmatprep.subr.mxu0 0.0
    %346 = vmatpush1.msra.mxu0 0.0
    %347 = vmatprep.subr.mxu0 0.0
    %348 = vmatpush1.msra.mxu0 0.0
    %349 = vmatprep.subr.mxu0 0.0
    %350 = vmatpush1.msra.mxu0 0.0
    %351 = vmatprep.subr.mxu0 0.0
    %352 = vmatpush1.msra.mxu0 0.0
    %353 = vmatprep.subr.mxu0 0.0
    %354 = vmatpush1.msra.mxu0 0.0
    %355 = vmatprep.subr.mxu0 0.0
    %356 = vmatpush1.msra.mxu0 0.0
    %357 = vmatprep.subr.mxu0 0.0
    %358 = vmatpush1.msra.mxu0 0.0
    %359 = vmatprep.subr.mxu0 0.0
    %360 = vmatpush1.msra.mxu0 0.0
    %361 = vmatprep.mubr.f32.mxu0 0.0
    %362 = vmatmul.mubr.f32.gmra.mrb[0].mxu0 %v273
    %v363 = vpop.f32.mrb[0].mxu0
    %v364 = vadd.f32 %v295, %v363
    %v365 = vpop.f32.mrb[0].mxu0
    %366 = vdwg.mxu0
    %367 = vmax.xlane.f32.xlu0 %v364
    %v368 = vpop.xlane.xlu0 %367
    %v369 = vsub.f32 %v364, %v368
    %v370 = vmul.f32 %v369, 1.442695
    %v371 = vpow.pop %v370
    %372 = vadd.xlane.f32.xlu0 %v371
    %v373 = vpop.xlane.xlu0 %372
    %v374 = vrcp.pop %v373
    %v375 = vmul.f32 %v373, %v374
    %v376 = vsub.f32 2.0, %v375
    %v377 = vmul.f32 %v374, %v376
    %v378 = vmul.f32 %v371, %v377
    %vm379 = vcmask 15360
    %380 = vst.msk [vmem:[#allocation8] sm:$0xff] %vm379, %v378
    // Predicated region
    $region34: #{tpu_custom_call.1} parent=1 // pred_check
      _
    $region35: #{tpu_custom_call.1} parent=1 // pred_check_branch
      %382 = sbr.rel (0) target = $region37
    $region36: #{tpu_custom_call.1} parent=1 // pred_region
      %s384 = ssub.s32 128, 32
      %385 = vsyncadd [#allocation4], %s384
      %s386 = sshll.u32 [#allocation8], 4
      %s387 = int_to_ptr.vmem [resolvable:$true] %s386
      %392 = dma.vmem_to_hbm [thread:$0]  %s387, 32, %s5, [#allocation4], 32, 32, 2
    $region37: #{tpu_custom_call.1} parent=1 // pred_fallthru
      _
    // Predicated region
    $region38: #{tpu_custom_call.1} parent=1 // pred_check
      _
    $region39: #{tpu_custom_call.1} parent=1 // pred_check_branch
      %394 = sbr.rel (0) target = $region41
    $region40: #{tpu_custom_call.1} parent=1 // pred_region
      %395 = dma.done [#allocation4], 128
    $region41: #{tpu_custom_call.1} parent=1 // pred_fallthru
      _
    %396 = vsyncpa [#allocation3], 1
    %397 = vsyncpa [#allocation6], 1
    %398 = vsyncpa [#allocation4], 1

</llo_original>
